<compile_context>
chip_gen: v5e
topology: v5e:2x2
jax: 0.10.0
libtpu: 0.0.40
codegen_flags: <defaults>
</compile_context>

<pallas_src>
import functools

import jax
import jax.numpy as jnp
from jax.experimental import pallas as pl
from jax.experimental.pallas import tpu as pltpu

HIDDEN = 1000      # module's hidden width
HIDDEN_PAD = 1024  # padded to a multiple of 128 lanes (exact: pads are zero)


def _use_bf16_vpu():
    """bf16 elementwise on v6e / v7x; f32 on older gens (no bf16 VPU on v5e)."""
    try:
        kind = jax.devices()[0].device_kind.lower()
    except Exception:
        return False
    return not any(t in kind for t in ("v2", "v3", "v4", "v5"))


def _netD_ess_cond_kernel(
    x_ref,      # (tb, dimx)                 f32 or bf16
    lab_ref,    # (tb, 1)                    int32
    w2_ref,     # (dimx + n_classes, Hp)     bf16 (label contribution + b2 folded in)
    w3_ref,     # (num_classes, Hp)          bf16
    b3_ref,     # (num_classes,)             f32  (SMEM)
    out_ref,    # (tb, num_classes)          f32
    *,
    num_classes,
    use_bf16_vpu,
):
    tb = x_ref.shape[0]
    dimx = x_ref.shape[1]
    n_cls = w2_ref.shape[0] - dimx

    xb = x_ref[...].astype(jnp.bfloat16)

    # Embedding -> Linear(ed,16) -> ReLU -> @W2_label + b2 is pre-baked per
    # class into the bottom n_cls rows of w2; a one-hot row selects it exactly.
    classes = jax.lax.broadcasted_iota(jnp.int32, (tb, n_cls), 1)
    onehot = (lab_ref[...] == classes).astype(jnp.bfloat16)       # (tb, n_cls)

    # main[0]: single MXU pass over [x | onehot] @ [W2_x ; (lab_h@W2_l + b2)].
    cat = jnp.concatenate([xb, onehot], axis=-1)                  # (tb, dimx+n_cls)
    h = jnp.dot(cat, w2_ref[...], preferred_element_type=jnp.float32)

    # main[1]: LeakyReLU(0.2) == max(h, 0.2*h)  (exact for slope < 1).
    ew = jnp.bfloat16 if use_bf16_vpu else jnp.float32
    h = h.astype(ew)
    h = jnp.maximum(h, h * jnp.asarray(0.2, dtype=ew))
    # main[2]: Dropout(p=0) == identity.

    # main[3]: Linear(Hp, num_classes).  num_classes is tiny (normally 1) ->
    # VPU multiply + XLU cross-lane reduce per class, f32 accumulation.
    w3 = w3_ref[...].astype(ew)
    cols = [
        jnp.sum((h * w3[c:c + 1, :]).astype(jnp.float32), axis=-1, keepdims=True)
        + b3_ref[c]
        for c in range(num_classes)
    ]
    out_ref[...] = cols[0] if num_classes == 1 else jnp.concatenate(cols, axis=-1)


def _pick_batch_tile(B):
    if B <= 256:
        return B  # single step; block == full dim is always legal
    # >=2 grid steps so v7x's second TensorCore gets work; cap at 512 rows so
    # per-step f32 temporaries stay well inside v5e's 16 MiB scoped-VMEM default.
    half = pl.cdiv(B, 2)
    return min(512, ((half + 255) // 256) * 256)


@functools.partial(jax.jit, static_argnames=("num_classes",))
def netD_ess_cond_forward(x, label, params, *, num_classes=1):
    """x: (B, dimx) f32 (or bf16), label: (B,) int, params: pack_params output."""
    B, dimx = x.shape
    lab2d = label.astype(jnp.int32).reshape(B, 1)

    tb = _pick_batch_tile(B)
    grid = (pl.cdiv(B, tb),)

    resident = lambda shape: pl.BlockSpec(shape, lambda i: (0, 0))
    kernel = functools.partial(
        _netD_ess_cond_kernel,
        num_classes=num_classes,
        use_bf16_vpu=_use_bf16_vpu(),
    )

    out2d = pl.pallas_call(
        kernel,
        out_shape=jax.ShapeDtypeStruct((B, num_classes), jnp.float32),
        grid=grid,
        in_specs=[
            pl.BlockSpec((tb, dimx), lambda i: (i, 0)),          # x     : batch-tiled
            pl.BlockSpec((tb, 1), lambda i: (i, 0)),             # label : batch-tiled
            resident(params["w2full"].shape),                    # w2full: resident
            resident(params["w3"].shape),                        # w3    : resident
            pl.BlockSpec(memory_space=pltpu.MemorySpace.SMEM),   # b3 scalars
        ],
        out_specs=pl.BlockSpec((tb, num_classes), lambda i: (i, 0)),
        compiler_params=pltpu.CompilerParams(
            dimension_semantics=("parallel",),
            vmem_limit_bytes=32 * 1024 * 1024,   # v7x default; safe on all gens
        ),
    )(x, lab2d, params["w2full"], params["w3"], params["b3"])

    # output.view(B, num_classes).squeeze(1)
    if num_classes == 1:
        return out2d[:, 0]
    return out2d


def init_params(key, n_classes, embedding_dim, dimx, num_classes=1):
    """Deterministic synthetic f32 'master' parameters matching module shapes."""
    ks = jax.random.split(key, 7)
    s = 0.05
    return {
        "emb_table": s * jax.random.normal(ks[0], (n_classes, embedding_dim), jnp.float32),
        "w1": s * jax.random.normal(ks[1], (embedding_dim, 16), jnp.float32),
        "b1": s * jax.random.normal(ks[2], (1, 16), jnp.float32),
        "w2": s * jax.random.normal(ks[3], (dimx + 16, HIDDEN), jnp.float32),
        "b2": s * jax.random.normal(ks[4], (1, HIDDEN), jnp.float32),
        "w3": s * jax.random.normal(ks[5], (HIDDEN, num_classes), jnp.float32),
        "b3": s * jax.random.normal(ks[6], (1, num_classes), jnp.float32),
    }


def pack_params(master, dimx, hidden_pad=HIDDEN_PAD):
    """Fold the label sub-net + b2 into extra W2 rows, pad hidden 1000->1024,
    cast weights to bf16; b3 stays a flat f32 vector for SMEM."""
    hidden = master["w2"].shape[1]
    pad = hidden_pad - hidden

    # Per-class hidden contribution (computed once, in f32):
    #   row[c] = ReLU(emb_table[c] @ W1 + b1) @ W2[dimx:] + b2
    lab_h = jnp.maximum(master["emb_table"] @ master["w1"] + master["b1"], 0.0)
    lab_rows = lab_h @ master["w2"][dimx:] + master["b2"]        # (n_classes, hidden)

    w2full = jnp.concatenate([master["w2"][:dimx], lab_rows], axis=0)
    w2full = jnp.pad(w2full, ((0, 0), (0, pad)))                 # (dimx+n_classes, Hp)
    w3 = jnp.pad(master["w3"], ((0, pad), (0, 0)))               # (Hp, C)

    return {
        "w2full": w2full.astype(jnp.bfloat16),
        "w3": w3.T.astype(jnp.bfloat16),                         # (C, Hp) bf16
        "b3": master["b3"].reshape(-1).astype(jnp.float32),      # (C,) f32 -> SMEM
    }


def _reference_forward(x, label, master, num_classes=1):
    """Pure-JAX f32 reference matching the PyTorch forward, for verification."""
    emb = jnp.take(master["emb_table"], label, axis=0)
    lab_h = jnp.maximum(emb @ master["w1"] + master["b1"], 0.0)
    concat = jnp.concatenate([x, lab_h], axis=1)
    h = concat @ master["w2"] + master["b2"]
    h = jnp.where(h > 0, h, 0.2 * h)
    out = h @ master["w3"] + master["b3"]
    out = out.reshape(x.shape[0], num_classes)
    return out[:, 0] if num_classes == 1 else out


if __name__ == "__main__":
    # Small shapes consistent with the module.
    B = 8
    dimx = 32
    n_classes = 4
    embedding_dim = 8
    num_classes = 1

    key = jax.random.PRNGKey(0)
    kx, kl, kp = jax.random.split(key, 3)

    x = jax.random.normal(kx, (B, dimx), jnp.float32)
    label = jax.random.randint(kl, (B,), 0, n_classes, jnp.int32)

    master = init_params(kp, n_classes, embedding_dim, dimx, num_classes)
    params = pack_params(master, dimx)

    out = netD_ess_cond_forward(x, label, params, num_classes=num_classes)
    out = jax.block_until_ready(out)

    ref = _reference_forward(x, label, master, num_classes)
    assert out.shape == (B,), out.shape
    # bf16 matmul operands / folded bf16 bias (f32 accumulation): ~1e-2 level.
    assert jnp.allclose(out, ref, atol=3e-2, rtol=3e-2), (out, ref)

    print("KERNEL_OK")
</pallas_src>

<mosaic_0001>
module attributes {stable_mosaic.version = 11 : i64} {
  func.func @_netD_ess_cond_kernel(%arg0: i32, %arg1: memref<8x32xf32, #tpu.memory_space<vmem>>, %arg2: memref<8x1xi32, #tpu.memory_space<vmem>>, %arg3: memref<36x1024xbf16, #tpu.memory_space<vmem>>, %arg4: memref<1x1024xbf16, #tpu.memory_space<vmem>>, %arg5: memref<1xf32, #tpu.memory_space<smem>>, %arg6: memref<8x1xf32, #tpu.memory_space<vmem>>) attributes {dimension_semantics = [#tpu.dimension_semantics<parallel>], iteration_bounds = array<i64: 1>, scalar_prefetch = 0 : i64, scratch_operands = 0 : i64, tpu.core_type = #tpu.core_type<tc>, window_params = [{transform_indices = @transform_0, window_bounds = array<i64: 8, 32>}, {transform_indices = @transform_1, window_bounds = array<i64: 8, 1>}, {pipeline_mode = #tpu.pipeline_mode<synchronous>, transform_indices = @transform_2, window_bounds = array<i64: 36, 1024>}, {pipeline_mode = #tpu.pipeline_mode<synchronous>, transform_indices = @transform_3, window_bounds = array<i64: 1, 1024>}, {transform_indices = @transform_4, window_bounds = array<i64: 1>}, {transform_indices = @transform_5, window_bounds = array<i64: 8, 1>}]} {
    %c0 = arith.constant 0 : index
    %c0_0 = arith.constant 0 : index
    %0 = vector.load %arg1[%c0, %c0_0] : memref<8x32xf32, #tpu.memory_space<vmem>>, vector<8x32xf32>
    %1 = arith.truncf %0 : vector<8x32xf32> to vector<8x32xbf16>
    %2 = tpu.iota {dimensions = array<i32: 1>} : vector<8x4xi32>
    %c0_1 = arith.constant 0 : index
    %c0_2 = arith.constant 0 : index
    %3 = vector.load %arg2[%c0_1, %c0_2] : memref<8x1xi32, #tpu.memory_space<vmem>>, vector<8x1xi32>
    %4 = vector.broadcast %3 : vector<8x1xi32> to vector<8x4xi32>
    %5 = arith.cmpi eq, %4, %2 : vector<8x4xi32>
    %6 = arith.extui %5 : vector<8x4xi1> to vector<8x4xi32>
    %7 = arith.sitofp %6 : vector<8x4xi32> to vector<8x4xf32>
    %8 = arith.truncf %7 : vector<8x4xf32> to vector<8x4xbf16>
    %9 = tpu.concatenate %1, %8 in 1 : vector<8x32xbf16>, vector<8x4xbf16> -> vector<8x36xbf16>
    %c0_3 = arith.constant 0 : index
    %c0_4 = arith.constant 0 : index
    %10 = vector.load %arg3[%c0_3, %c0_4] : memref<36x1024xbf16, #tpu.memory_space<vmem>>, vector<36x1024xbf16>
    %cst = arith.constant dense<0.000000e+00> : vector<8x1024xf32>
    %11 = tpu.matmul %9, %10, %cst {dimension_numbers = #tpu.dot_dimension_numbers<[1], [0], [0], [1], [0, 0, 1, 1], [], []>} : vector<8x36xbf16>, vector<36x1024xbf16>, vector<8x1024xf32> -> vector<8x1024xf32>
    %12 = arith.truncf %11 : vector<8x1024xf32> to vector<8x1024xbf16>
    %cst_5 = arith.constant 2.001950e-01 : bf16
    %13 = vector.broadcast %cst_5 : bf16 to vector<8x1024xbf16>
    %14 = arith.mulf %12, %13 : vector<8x1024xbf16>
    %15 = arith.maximumf %12, %14 : vector<8x1024xbf16>
    %c0_6 = arith.constant 0 : index
    %c0_7 = arith.constant 0 : index
    %16 = vector.load %arg4[%c0_6, %c0_7] : memref<1x1024xbf16, #tpu.memory_space<vmem>>, vector<1x1024xbf16>
    %17 = vector.broadcast %16 : vector<1x1024xbf16> to vector<8x1024xbf16>
    %18 = arith.mulf %15, %17 : vector<8x1024xbf16>
    %19 = arith.extf %18 : vector<8x1024xbf16> to vector<8x1024xf32>
    %cst_8 = arith.constant dense<0.000000e+00> : vector<8xf32>
    %20 = vector.multi_reduction <add>, %19, %cst_8 [1] : vector<8x1024xf32> to vector<8xf32>
    %21 = vector.shape_cast %20 : vector<8xf32> to vector<8x1xf32>
    %c0_9 = arith.constant 0 : index
    %22 = memref.load %arg5[%c0_9] : memref<1xf32, #tpu.memory_space<smem>>
    %23 = vector.broadcast %22 : f32 to vector<8x1xf32>
    %24 = arith.addf %21, %23 : vector<8x1xf32>
    %c0_10 = arith.constant 0 : index
    %c0_11 = arith.constant 0 : index
    %25 = vector.load %arg6[%c0_10, %c0_11] : memref<8x1xf32, #tpu.memory_space<vmem>>, vector<8x1xf32>
    tpu.vector_store %arg6[%c0_10, %c0_11], %24 {strides = array<i32>} : memref<8x1xf32, #tpu.memory_space<vmem>>, vector<8x1xf32>,
    return
  }
  func.func @transform_0(%arg0: i32) -> (i32, i32) {
    %c0_i32 = arith.constant 0 : i32
    %c0_i32_0 = arith.constant 0 : i32
    return %arg0, %c0_i32 : i32, i32
  }
  func.func @transform_1(%arg0: i32) -> (i32, i32) {
    %c0_i32 = arith.constant 0 : i32
    %c0_i32_0 = arith.constant 0 : i32
    return %arg0, %c0_i32 : i32, i32
  }
  func.func @transform_2(%arg0: i32) -> (i32, i32) {
    %c0_i32 = arith.constant 0 : i32
    %c0_i32_0 = arith.constant 0 : i32
    %c0_i32_1 = arith.constant 0 : i32
    return %c0_i32, %c0_i32_0 : i32, i32
  }
  func.func @transform_3(%arg0: i32) -> (i32, i32) {
    %c0_i32 = arith.constant 0 : i32
    %c0_i32_0 = arith.constant 0 : i32
    %c0_i32_1 = arith.constant 0 : i32
    return %c0_i32, %c0_i32_0 : i32, i32
  }
  func.func @transform_4(%arg0: i32) -> i32 {
    %c0_i32 = arith.constant 0 : i32
    %c0_i32_0 = arith.constant 0 : i32
    return %c0_i32 : i32
  }
  func.func @transform_5(%arg0: i32) -> (i32, i32) {
    %c0_i32 = arith.constant 0 : i32
    %c0_i32_0 = arith.constant 0 : i32
    return %arg0, %c0_i32 : i32, i32
  }
}

</mosaic_0001>

<llo_original>
// kernel: netD_ess_cond_forward.1
$region0: #{netD_ess_cond_forward.1}
  #allocation0 [shape = 'u32[]', space=smem, size = 0x4, offset = 0x4, fixed_abs, tag = 'smem constant byte address 0x4 - core index']
  #allocation1 [shape = 'u32[72,128]{1,0:T(1,128)}', space=vmem, size = 0x9000, scoped, tag = 'internal scratch']
  #allocation2 [shape = 'f32[1]{0:T(128)S(6)}', space=smem, size = 0x200, scoped, tag = 'scoped memory for netD_ess_cond_forward.1']
  %s0 = inlined_call_operand.vmem [shape: f32[8,32], index: 0, kind: input, shape index: {}]
  %s1 = inlined_call_operand.vmem [shape: s32[8,1], index: 1, kind: input, shape index: {}]
  %s2 = inlined_call_operand.hbm [shape: bf16[36,1024], index: 2, kind: input, shape index: {}]
  %s3 = inlined_call_operand.hbm [shape: bf16[1,1024], index: 3, kind: input, shape index: {}]
  %s4 = inlined_call_operand.<no memory space> [shape: f32[1], index: 4, kind: input, shape index: {}]
  %s5 = inlined_call_operand.vmem [shape: f32[8,1], index: 5, kind: output, shape index: {}]
  %s6 = sld [smem:[#allocation0]]
  $region38: #{netD_ess_cond_forward.1} parent=0
    _
  %s8 = ssub.s32 1, %s6
  %s9 = scalar_select 0, %s8, %s6
  %10 = sst [smem:[#allocation2]] %s4
  $region1: #{netD_ess_cond_forward.1} parent=0
    #allocation3 [shape = 'u8[81920]{0}', space=vmem, size = 0x14000, scoped, tag = 'input window, operand 2, single buffered']
    #allocation4 [shape = 's32[1]{0}', space=sflag, size = 0x4, scoped, tag = 'scoped memory for netD_ess_cond_forward.1']
    #allocation5 [shape = 'u8[4096]{0}', space=vmem, size = 0x1000, scoped, tag = 'input window, operand 3, single buffered']
    #allocation6 [shape = 's32[1]{0}', space=sflag, size = 0x4, scoped, tag = 'scoped memory for netD_ess_cond_forward.1']
    %11 = vsyncpa [#allocation4], 0
    %12 = vsyncpa [#allocation6], 0
    // Predicated region
    $region2: #{netD_ess_cond_forward.1} parent=1 // pred_check
      _
    $region3: #{netD_ess_cond_forward.1} parent=1 // pred_check_branch
      %14 = sbr.rel (0) target = $region5
    $region4: #{netD_ess_cond_forward.1} parent=1 // pred_region
      _
    $region5: #{netD_ess_cond_forward.1} parent=1 // pred_fallthru
      _
    // Predicated region
    $region6: #{netD_ess_cond_forward.1} parent=1 // pred_check
      _
    $region7: #{netD_ess_cond_forward.1} parent=1 // pred_check_branch
      %16 = sbr.rel (0) target = $region9
    $region8: #{netD_ess_cond_forward.1} parent=1 // pred_region
      _
    $region9: #{netD_ess_cond_forward.1} parent=1 // pred_fallthru
      _
    // Predicated region
    $region10: #{netD_ess_cond_forward.1} parent=1 // pred_check
      _
    $region11: #{netD_ess_cond_forward.1} parent=1 // pred_check_branch
      %18 = sbr.rel (0) target = $region13
    $region12: #{netD_ess_cond_forward.1} parent=1 // pred_region
      %20 = vsyncadd [#allocation4], 0
      %s21 = sshll.u32 %s2, 4
      %s22 = int_to_ptr.hbm [resolvable:$true] %s21
      %s23 = sshll.u32 [#allocation3], 4
      %s24 = int_to_ptr.vmem [resolvable:$true] %s23
      %29 = dma.hbm_to_vmem [thread:$0]  %s22, 2560, %s24, [#allocation4], 512, 512, 32
    $region13: #{netD_ess_cond_forward.1} parent=1 // pred_fallthru
      _
    // Predicated region
    $region14: #{netD_ess_cond_forward.1} parent=1 // pred_check
      _
    $region15: #{netD_ess_cond_forward.1} parent=1 // pred_check_branch
      %31 = sbr.rel (0) target = $region17
    $region16: #{netD_ess_cond_forward.1} parent=1 // pred_region
      %33 = vsyncadd [#allocation6], 0
      %s35 = sshll.u32 %s3, 4
      %s36 = int_to_ptr.hbm [resolvable:$true] %s35
      %s37 = sshll.u32 [#allocation5], 4
      %s38 = int_to_ptr.vmem [resolvable:$true] %s37
      %40 = dma.hbm_to_vmem [thread:$0]  %s36, 128, %s38, [#allocation6]
    $region17: #{netD_ess_cond_forward.1} parent=1 // pred_fallthru
      _
    // Predicated region
    $region18: #{netD_ess_cond_forward.1} parent=1 // pred_check
      _
    $region19: #{netD_ess_cond_forward.1} parent=1 // pred_check_branch
      %42 = sbr.rel (0) target = $region21
    $region20: #{netD_ess_cond_forward.1} parent=1 // pred_region
      _
    $region21: #{netD_ess_cond_forward.1} parent=1 // pred_fallthru
      _
    // Predicated region
    $region22: #{netD_ess_cond_forward.1} parent=1 // pred_check
      _
    $region23: #{netD_ess_cond_forward.1} parent=1 // pred_check_branch
      %44 = sbr.rel (0) target = $region25
    $region24: #{netD_ess_cond_forward.1} parent=1 // pred_region
      %46 = dma.done [#allocation4], 2560
    $region25: #{netD_ess_cond_forward.1} parent=1 // pred_fallthru
      _
    // Predicated region
    $region26: #{netD_ess_cond_forward.1} parent=1 // pred_check
      _
    $region27: #{netD_ess_cond_forward.1} parent=1 // pred_check_branch
      %48 = sbr.rel (0) target = $region29
    $region28: #{netD_ess_cond_forward.1} parent=1 // pred_region
      %50 = dma.done [#allocation6], 128
    $region29: #{netD_ess_cond_forward.1} parent=1 // pred_fallthru
      _
    %v52 = vld [vmem:[%s0] sm:$0xff]
    %v53 = vpack.c.bf16 %v52, %v52
    %v54 = vlaneseq
    %v55 = vand.u32 %v54, 127
    %v56 = vld [vmem:[%s1] sm:$0xff]
    %57 = vset.pattern.permute.xlu0 0
    %58 = vperm.xlu0 %57, %v56
    %v59 = vpop.permute.xlu0 %58
    %vm60 = vcmp.eq.s32.totalorder %v59, %v55
    %v61 = vsel %vm60, 1, 0
    %v62 = vcvt.s32.f32 %v61
    %v63 = vpack.c.bf16 %v62, %v62
    %v65 = vunpack.c.l.b16 %v63
    %v66 = vpack.c.b16 %v65, %v65
    %67 = vrot.lane.b32.xlu0 %v66, 32
    %v68 = vpop.permute.xlu0 %67
    %vm69 = vcmask 261120
    %v72 = vsel %vm69, %v53, %v68
    %v73 = vld [vmem:[#allocation3] sm:$0xff]
    %v74 = vld [vmem:[#allocation3 + $0x8] sm:$0xff]
    %v75 = vld [vmem:[#allocation3 + $0x10] sm:$0xff]
    %v76 = vld [vmem:[#allocation3 + $0x18] sm:$0xff]
    %v77 = vld [vmem:[#allocation3 + $0x20] sm:$0xff]
    %v78 = vld [vmem:[#allocation3 + $0x28] sm:$0xff]
    %v79 = vld [vmem:[#allocation3 + $0x30] sm:$0xff]
    %v80 = vld [vmem:[#allocation3 + $0x38] sm:$0xff]
    %v81 = vld [vmem:[#allocation3 + $0x40] sm:$0xff]
    %v82 = vld [vmem:[#allocation3 + $0x48] sm:$0xff]
    %v83 = vld [vmem:[#allocation3 + $0x50] sm:$0xff]
    %v84 = vld [vmem:[#allocation3 + $0x58] sm:$0xff]
    %v85 = vld [vmem:[#allocation3 + $0x60] sm:$0xff]
    %v86 = vld [vmem:[#allocation3 + $0x68] sm:$0xff]
    %v87 = vld [vmem:[#allocation3 + $0x70] sm:$0xff]
    %v88 = vld [vmem:[#allocation3 + $0x78] sm:$0xff]
    %v89 = vld [vmem:[#allocation3 + $0x80] sm:$0x33]
    %v90 = vld [vmem:[#allocation3 + $0x88] sm:$0x33]
    %v91 = vld [vmem:[#allocation3 + $0x90] sm:$0x33]
    %v92 = vld [vmem:[#allocation3 + $0x98] sm:$0x33]
    %v113 = vunpack.c.l.b16 %v73
    %v114 = vunpack.c.h.b16 %v73
    %v115 = vunpack.c.l.b16 %v74
    %v116 = vunpack.c.h.b16 %v74
    %v117 = vunpack.c.l.b16 %v75
    %v118 = vunpack.c.h.b16 %v75
    %v119 = vunpack.c.l.b16 %v76
    %v120 = vunpack.c.h.b16 %v76
    %v121 = vunpack.c.l.b16 %v77
    %v122 = vunpack.c.h.b16 %v77
    %v123 = vunpack.c.l.b16 %v78
    %v124 = vunpack.c.h.b16 %v78
    %v125 = vunpack.c.l.b16 %v79
    %v126 = vunpack.c.h.b16 %v79
    %v127 = vunpack.c.l.b16 %v80
    %v128 = vunpack.c.h.b16 %v80
    %v129 = vunpack.c.l.b16 %v81
    %v130 = vunpack.c.h.b16 %v81
    %v131 = vunpack.c.l.b16 %v82
    %v132 = vunpack.c.h.b16 %v82
    %v133 = vunpack.c.l.b16 %v83
    %v134 = vunpack.c.h.b16 %v83
    %v135 = vunpack.c.l.b16 %v84
    %v136 = vunpack.c.h.b16 %v84
    %v137 = vunpack.c.l.b16 %v85
    %v138 = vunpack.c.h.b16 %v85
    %v139 = vunpack.c.l.b16 %v86
    %v140 = vunpack.c.h.b16 %v86
    %v141 = vunpack.c.l.b16 %v87
    %v142 = vunpack.c.h.b16 %v87
    %v143 = vunpack.c.l.b16 %v88
    %v144 = vunpack.c.h.b16 %v88
    %v145 = vunpack.c.l.b16 %v89
    %v146 = vunpack.c.h.b16 %v89
    %v147 = vunpack.c.l.b16 %v90
    %v148 = vunpack.c.h.b16 %v90
    %v149 = vunpack.c.l.b16 %v91
    %v150 = vunpack.c.h.b16 %v91
    %v151 = vunpack.c.l.b16 %v92
    %v152 = vunpack.c.h.b16 %v92
    %v153 = vpack.c.b16 %v121, %v113
    %v154 = vpack.c.b16 %v122, %v114
    %v155 = vpack.c.b16 %v123, %v115
    %v156 = vpack.c.b16 %v124, %v116
    %v157 = vpack.c.b16 %v125, %v117
    %v158 = vpack.c.b16 %v126, %v118
    %v159 = vpack.c.b16 %v127, %v119
    %v160 = vpack.c.b16 %v128, %v120
    %v161 = vpack.c.b16 %v137, %v129
    %v162 = vpack.c.b16 %v138, %v130
    %v163 = vpack.c.b16 %v139, %v131
    %v164 = vpack.c.b16 %v140, %v132
    %v165 = vpack.c.b16 %v141, %v133
    %v166 = vpack.c.b16 %v142, %v134
    %v167 = vpack.c.b16 %v143, %v135
    %v168 = vpack.c.b16 %v144, %v136
    %v169 = vpack.c.b16 %v145, %v145
    %v170 = vpack.c.b16 %v146, %v146
    %v171 = vpack.c.b16 %v147, %v147
    %v172 = vpack.c.b16 %v148, %v148
    %v173 = vpack.c.b16 %v149, %v149
    %v174 = vpack.c.b16 %v150, %v150
    %v175 = vpack.c.b16 %v151, %v151
    %v176 = vpack.c.b16 %v152, %v152
    %vm193 = vcmask 293888
    %v194 = vsel %vm193, %v72, 0
    %vm196 = vcmask 1041408
    %v198 = vsel %vm196, %v169, 0
    %v201 = vsel %vm196, %v170, 0
    %v204 = vsel %vm196, %v171, 0
    %v207 = vsel %vm196, %v172, 0
    %v210 = vsel %vm196, %v173, 0
    %v213 = vsel %vm196, %v174, 0
    %v216 = vsel %vm196, %v175, 0
    %v219 = vsel %vm196, %v176, 0
    %221 = vmatpush.bf16.msra.mxu0 0
    %222 = vmatpush.bf16.msra.mxu0 0
    %223 = vmatpush.bf16.msra.mxu0 0
    %224 = vmatpush.bf16.msra.mxu0 0
    %225 = vmatpush.bf16.msra.mxu0 0
    %226 = vmatpush.bf16.msra.mxu0 %v198
    %227 = vmatpush.bf16.msra.mxu0 %v161
    %228 = vmatpush.bf16.msra.mxu0 %v153
    %229 = vmatmul.bf16.gmra.mxu0 %v194
    %v230 = vpop.f32.mrf.mxu0
    %v231 = vadd.f32 0.0, %v230
    %v232 = vpop.f32.mrf.mxu0
    %233 = vdwg.mxu0
    %234 = vmatpush.bf16.msra.mxu0 0
    %235 = vmatpush.bf16.msra.mxu0 0
    %236 = vmatpush.bf16.msra.mxu0 0
    %237 = vmatpush.bf16.msra.mxu0 0
    %238 = vmatpush.bf16.msra.mxu0 0
    %239 = vmatpush.bf16.msra.mxu0 %v201
    %240 = vmatpush.bf16.msra.mxu0 %v162
    %241 = vmatpush.bf16.msra.mxu0 %v154
    %242 = vmatmul.bf16.gmra.mxu0 %v194
    %v243 = vpop.f32.mrf.mxu0
    %v244 = vadd.f32 0.0, %v243
    %v245 = vpop.f32.mrf.mxu0
    %246 = vdwg.mxu0
    %247 = vmatpush.bf16.msra.mxu0 0
    %248 = vmatpush.bf16.msra.mxu0 0
    %249 = vmatpush.bf16.msra.mxu0 0
    %250 = vmatpush.bf16.msra.mxu0 0
    %251 = vmatpush.bf16.msra.mxu0 0
    %252 = vmatpush.bf16.msra.mxu0 %v204
    %253 = vmatpush.bf16.msra.mxu0 %v163
    %254 = vmatpush.bf16.msra.mxu0 %v155
    %255 = vmatmul.bf16.gmra.mxu0 %v194
    %v256 = vpop.f32.mrf.mxu0
    %v257 = vadd.f32 0.0, %v256
    %v258 = vpop.f32.mrf.mxu0
    %259 = vdwg.mxu0
    %260 = vmatpush.bf16.msra.mxu0 0
    %261 = vmatpush.bf16.msra.mxu0 0
    %262 = vmatpush.bf16.msra.mxu0 0
    %263 = vmatpush.bf16.msra.mxu0 0
    %264 = vmatpush.bf16.msra.mxu0 0
    %265 = vmatpush.bf16.msra.mxu0 %v207
    %266 = vmatpush.bf16.msra.mxu0 %v164
    %267 = vmatpush.bf16.msra.mxu0 %v156
    %268 = vmatmul.bf16.gmra.mxu0 %v194
    %v269 = vpop.f32.mrf.mxu0
    %v270 = vadd.f32 0.0, %v269
    %v271 = vpop.f32.mrf.mxu0
    %272 = vdwg.mxu0
    %273 = vmatpush.bf16.msra.mxu0 0
    %274 = vmatpush.bf16.msra.mxu0 0
    %275 = vmatpush.bf16.msra.mxu0 0
    %276 = vmatpush.bf16.msra.mxu0 0
    %277 = vmatpush.bf16.msra.mxu0 0
    %278 = vmatpush.bf16.msra.mxu0 %v210
    %279 = vmatpush.bf16.msra.mxu0 %v165
    %280 = vmatpush.bf16.msra.mxu0 %v157
    %281 = vmatmul.bf16.gmra.mxu0 %v194
    %v282 = vpop.f32.mrf.mxu0
    %v283 = vadd.f32 0.0, %v282
    %v284 = vpop.f32.mrf.mxu0
    %285 = vdwg.mxu0
    %286 = vmatpush.bf16.msra.mxu0 0
    %287 = vmatpush.bf16.msra.mxu0 0
    %288 = vmatpush.bf16.msra.mxu0 0
    %289 = vmatpush.bf16.msra.mxu0 0
    %290 = vmatpush.bf16.msra.mxu0 0
    %291 = vmatpush.bf16.msra.mxu0 %v213
    %292 = vmatpush.bf16.msra.mxu0 %v166
    %293 = vmatpush.bf16.msra.mxu0 %v158
    %294 = vmatmul.bf16.gmra.mxu0 %v194
    %v295 = vpop.f32.mrf.mxu0
    %v296 = vadd.f32 0.0, %v295
    %v297 = vpop.f32.mrf.mxu0
    %298 = vdwg.mxu0
    %299 = vmatpush.bf16.msra.mxu0 0
    %300 = vmatpush.bf16.msra.mxu0 0
    %301 = vmatpush.bf16.msra.mxu0 0
    %302 = vmatpush.bf16.msra.mxu0 0
    %303 = vmatpush.bf16.msra.mxu0 0
    %304 = vmatpush.bf16.msra.mxu0 %v216
    %305 = vmatpush.bf16.msra.mxu0 %v167
    %306 = vmatpush.bf16.msra.mxu0 %v159
    %307 = vmatmul.bf16.gmra.mxu0 %v194
    %v308 = vpop.f32.mrf.mxu0
    %v309 = vadd.f32 0.0, %v308
    %v310 = vpop.f32.mrf.mxu0
    %311 = vdwg.mxu0
    %312 = vmatpush.bf16.msra.mxu0 0
    %313 = vmatpush.bf16.msra.mxu0 0
    %314 = vmatpush.bf16.msra.mxu0 0
    %315 = vmatpush.bf16.msra.mxu0 0
    %316 = vmatpush.bf16.msra.mxu0 0
    %317 = vmatpush.bf16.msra.mxu0 %v219
    %318 = vmatpush.bf16.msra.mxu0 %v168
    %319 = vmatpush.bf16.msra.mxu0 %v160
    %320 = vmatmul.bf16.gmra.mxu0 %v194
    %v321 = vpop.f32.mrf.mxu0
    %v322 = vadd.f32 0.0, %v321
    %v323 = vpop.f32.mrf.mxu0
    %324 = vdwg.mxu0
    %v325 = vpack.c.bf16 %v244, %v231
    %v326 = vpack.c.bf16 %v270, %v257
    %v327 = vpack.c.bf16 %v296, %v283
    %v328 = vpack.c.bf16 %v322, %v309
    %v329 = vunpack.c.l.bf16 %v325
    %v330 = vunpack.c.h.bf16 %v325
    %v331 = vunpack.c.l.bf16 %v326
    %v332 = vunpack.c.h.bf16 %v326
    %v333 = vunpack.c.l.bf16 %v327
    %v334 = vunpack.c.h.bf16 %v327
    %v335 = vunpack.c.l.bf16 %v328
    %v336 = vunpack.c.h.bf16 %v328
    %v337 = vmul.f32 %v329, 0.20019531
    %v338 = vmul.f32 %v330, 0.20019531
    %v339 = vmul.f32 %v331, 0.20019531
    %v340 = vmul.f32 %v332, 0.20019531
    %v341 = vmul.f32 %v333, 0.20019531
    %v342 = vmul.f32 %v334, 0.20019531
    %v343 = vmul.f32 %v335, 0.20019531
    %v344 = vmul.f32 %v336, 0.20019531
    %v345 = vpack.c.bf16 %v338, %v337
    %v346 = vpack.c.bf16 %v340, %v339
    %v347 = vpack.c.bf16 %v342, %v341
    %v348 = vpack.c.bf16 %v344, %v343
    %v349 = vunpack.c.l.bf16 %v345
    %v350 = vunpack.c.h.bf16 %v345
    %v351 = vunpack.c.l.bf16 %v346
    %v352 = vunpack.c.h.bf16 %v346
    %v353 = vunpack.c.l.bf16 %v347
    %v354 = vunpack.c.h.bf16 %v347
    %v355 = vunpack.c.l.bf16 %v348
    %v356 = vunpack.c.h.bf16 %v348
    %v357 = vmax.f32 %v329, %v349
    %v358 = vmax.f32 %v330, %v350
    %v359 = vmax.f32 %v331, %v351
    %v360 = vmax.f32 %v332, %v352
    %v361 = vmax.f32 %v333, %v353
    %v362 = vmax.f32 %v334, %v354
    %v363 = vmax.f32 %v335, %v355
    %v364 = vmax.f32 %v336, %v356
    %v365 = vpack.c.bf16 %v358, %v357
    %v366 = vpack.c.bf16 %v360, %v359
    %v367 = vpack.c.bf16 %v362, %v361
    %v368 = vpack.c.bf16 %v364, %v363
    %v369 = vld [vmem:[#allocation5] sm:$0xff]
    %371 = vst [vmem:[#allocation1] ss:$9 sm:$0xff] %v369
    %v372 = vld [vmem:[#allocation1] sm:$0xff]
    %v373 = vld [vmem:[#allocation1 + $0x9] sm:$0xff]
    %v374 = vld [vmem:[#allocation1 + $0x12] sm:$0xff]
    %v375 = vld [vmem:[#allocation1 + $0x1b] sm:$0xff]
    %v376 = vld [vmem:[#allocation1 + $0x24] sm:$0xff]
    %v377 = vld [vmem:[#allocation1 + $0x2d] sm:$0xff]
    %v378 = vld [vmem:[#allocation1 + $0x36] sm:$0xff]
    %v379 = vld [vmem:[#allocation1 + $0x3f] sm:$0xff]
    %v380 = vpack.i.b16 %v372, %v372
    %v382 = vperm.slane %v380, 0
    %v383 = vpack.i.b16 %v373, %v373
    %v385 = vperm.slane %v383, 0
    %v386 = vpack.i.b16 %v374, %v374
    %v388 = vperm.slane %v386, 0
    %v389 = vpack.i.b16 %v375, %v375
    %v391 = vperm.slane %v389, 0
    %v392 = vpack.i.b16 %v376, %v376
    %v394 = vperm.slane %v392, 0
    %v395 = vpack.i.b16 %v377, %v377
    %v397 = vperm.slane %v395, 0
    %v398 = vpack.i.b16 %v378, %v378
    %v400 = vperm.slane %v398, 0
    %v401 = vpack.i.b16 %v379, %v379
    %v403 = vperm.slane %v401, 0
    %v404 = vunpack.c.l.bf16 %v365
    %v405 = vunpack.c.h.bf16 %v365
    %v406 = vunpack.c.l.bf16 %v366
    %v407 = vunpack.c.h.bf16 %v366
    %v408 = vunpack.c.l.bf16 %v367
    %v409 = vunpack.c.h.bf16 %v367
    %v410 = vunpack.c.l.bf16 %v368
    %v411 = vunpack.c.h.bf16 %v368
    %v412 = vunpack.c.l.bf16 %v382
    %v413 = vunpack.c.l.bf16 %v385
    %v414 = vunpack.c.l.bf16 %v388
    %v415 = vunpack.c.l.bf16 %v391
    %v416 = vunpack.c.l.bf16 %v394
    %v417 = vunpack.c.l.bf16 %v397
    %v418 = vunpack.c.l.bf16 %v400
    %v419 = vunpack.c.l.bf16 %v403
    %v420 = vmul.f32 %v404, %v412
    %v421 = vmul.f32 %v405, %v413
    %v422 = vmul.f32 %v406, %v414
    %v423 = vmul.f32 %v407, %v415
    %v424 = vmul.f32 %v408, %v416
    %v425 = vmul.f32 %v409, %v417
    %v426 = vmul.f32 %v410, %v418
    %v427 = vmul.f32 %v411, %v419
    %v428 = vpack.c.bf16 %v420, %v420
    %v429 = vpack.c.bf16 %v421, %v421
    %v430 = vpack.c.bf16 %v422, %v422
    %v431 = vpack.c.bf16 %v423, %v423
    %v432 = vpack.c.bf16 %v424, %v424
    %v433 = vpack.c.bf16 %v425, %v425
    %v434 = vpack.c.bf16 %v426, %v426
    %v435 = vpack.c.bf16 %v427, %v427
    %v436 = vunpack.c.l.bf16 %v428
    %v437 = vunpack.c.l.bf16 %v429
    %v438 = vunpack.c.l.bf16 %v430
    %v439 = vunpack.c.l.bf16 %v431
    %v440 = vunpack.c.l.bf16 %v432
    %v441 = vunpack.c.l.bf16 %v433
    %v442 = vunpack.c.l.bf16 %v434
    %v443 = vunpack.c.l.bf16 %v435
    %v444 = vadd.f32 %v436, %v437
    %v445 = vadd.f32 %v444, %v438
    %v446 = vadd.f32 %v445, %v439
    %v447 = vadd.f32 %v446, %v440
    %v448 = vadd.f32 %v447, %v441
    %v449 = vadd.f32 %v448, %v442
    %v450 = vadd.f32 %v449, %v443
    %451 = vadd.xlane.f32.xlu0 %v450
    %v452 = vpop.xlane.xlu0 %451
    %s453 = sld [smem:[#allocation2]]
    %v454 = vstv %s453
    %v455 = vadd.f32 %v452, %v454
    %vm456 = vcmask 7168
    %457 = vst.msk [vmem:[%s5] sm:$0xff] %vm456, %v455
    // Predicated region
    $region30: #{netD_ess_cond_forward.1} parent=1 // pred_check
      _
    $region31: #{netD_ess_cond_forward.1} parent=1 // pred_check_branch
      %459 = sbr.rel (0) target = $region33
    $region32: #{netD_ess_cond_forward.1} parent=1 // pred_region
      _
    $region33: #{netD_ess_cond_forward.1} parent=1 // pred_fallthru
      _
    // Predicated region
    $region34: #{netD_ess_cond_forward.1} parent=1 // pred_check
      _
    $region35: #{netD_ess_cond_forward.1} parent=1 // pred_check_branch
      %461 = sbr.rel (0) target = $region37
    $region36: #{netD_ess_cond_forward.1} parent=1 // pred_region
      _
    $region37: #{netD_ess_cond_forward.1} parent=1 // pred_fallthru
      _
    %462 = vsyncpa [#allocation4], 1
    %463 = vsyncpa [#allocation6], 1

</llo_original>
